<compile_context>
chip_gen: v6e
topology: v6e:2x2x1
jax: 0.10.0
libtpu: 0.0.40
codegen_flags: <defaults>
</compile_context>

<pallas_src>
import functools

import jax
import jax.numpy as jnp
from jax.experimental import pallas as pl
from jax.experimental.pallas import tpu as pltpu


LANE = 128       # lane width (batch-tile granularity)
SUBLANE = 8      # sublane multiple (feature padding granularity)
MAX_TB = 4096    # max batch-tile width (columns) per grid step


def _round_up(x, m):
    return ((x + m - 1) // m) * m


def _acasnet_kernel(*refs, n_layers):
    """Fused MLP forward on one batch tile.

    refs = (x_ref, w0, b0, w1, b1, ..., o_ref)
      x_ref : (IN_PAD, TB)            input activations (features x batch)
      w_l   : (out_pad_l, in_pad_l)   zero-padded weights (PyTorch (out, in) layout)
      b_l   : (out_pad_l, 1)          zero-padded biases
      o_ref : (OUT_PAD, TB)           output tile
    """
    x_ref = refs[0]
    o_ref = refs[-1]
    w_refs = [refs[1 + 2 * l] for l in range(n_layers)]
    b_refs = [refs[2 + 2 * l] for l in range(n_layers)]

    h = x_ref[...]
    # Static (unrolled) layer loop — n_layers is a compile-time constant; the
    # scheduler can overlap layer l+1's MXU pushes with layer l's VPU ReLU.
    for l in range(n_layers):
        w = w_refs[l][...]                        # (out_pad, in_pad)
        b = b_refs[l][...]                        # (out_pad, 1) -> lane broadcast
        h = jnp.dot(w, h, preferred_element_type=jnp.float32) + b
        if l < n_layers - 1:                      # ReLU on all but the last layer
            h = jnp.maximum(h, 0.0)
    o_ref[...] = h                                # full-tile, lane-dense store


def pack_acasnet_params(weights, biases):
    """Pad/stage parameters once (hoisted out of the per-call path).

    weights: list of PyTorch-convention W_l of shape (out_l, in_l)
    biases:  list of b_l of shape (out_l,)
    returns: flat tuple (w0, b0, w1, b1, ...) of padded float32 arrays.
    """
    packed = []
    for w, b in zip(weights, biases):
        out_f, in_f = w.shape
        out_p = _round_up(out_f, SUBLANE)
        in_p = _round_up(in_f, SUBLANE)
        wp = jnp.zeros((out_p, in_p), jnp.float32).at[:out_f, :in_f].set(
            jnp.asarray(w, jnp.float32))
        bp = jnp.zeros((out_p, 1), jnp.float32).at[:out_f, 0].set(
            jnp.asarray(b, jnp.float32))
        packed.extend([wp, bp])
    return tuple(packed)


@functools.partial(jax.jit, static_argnums=(2,))
def acasnet_forward(x, packed_params, output_size):
    """AcasNet forward: x (batch, input_size) -> (batch, output_size) float32."""
    n_layers = len(packed_params) // 2
    ws = packed_params[0::2]
    bs = packed_params[1::2]

    batch, input_size = x.shape
    in_pad = ws[0].shape[1]
    out_pad = ws[-1].shape[0]

    # Batch tiling: lane-dense tiles; pad batch so the grid divides evenly.
    tb = min(MAX_TB, _round_up(batch, LANE))
    b_pad = _round_up(batch, tb)
    grid = (b_pad // tb,)

    # Feature-major input: (in_pad, b_pad), zero padded.
    x_fb = jnp.zeros((in_pad, b_pad), jnp.float32)
    x_fb = x_fb.at[:input_size, :batch].set(jnp.asarray(x, jnp.float32).T)

    in_specs = [pl.BlockSpec((in_pad, tb), lambda i: (0, i))]
    for w, b in zip(ws, bs):
        # Constant index_map -> copied to VMEM once, resident across batch tiles.
        in_specs.append(pl.BlockSpec(w.shape, lambda i: (0, 0)))
        in_specs.append(pl.BlockSpec(b.shape, lambda i: (0, 0)))

    out_fb = pl.pallas_call(
        functools.partial(_acasnet_kernel, n_layers=n_layers),
        out_shape=jax.ShapeDtypeStruct((out_pad, b_pad), jnp.float32),
        grid=grid,
        in_specs=in_specs,
        out_specs=pl.BlockSpec((out_pad, tb), lambda i: (0, i)),
        compiler_params=pltpu.CompilerParams(
            dimension_semantics=("parallel",),   # megacore: split batch tiles across TCs
            vmem_limit_bytes=32 * 1024 * 1024,
        ),
    )(x_fb, *packed_params)

    return out_fb[:output_size, :batch].T


def _reference_forward(x, weights, biases):
    """Plain-JAX reference mirroring the PyTorch forward."""
    h = x.astype(jnp.float32)
    for l, (w, b) in enumerate(zip(weights, biases)):
        h = h @ jnp.transpose(w) + b
        if l < len(weights) - 1:
            h = jnp.maximum(h, 0.0)
    return h


def _init_params(key, input_size, hidden_sizes, output_size):
    """Deterministic nn.Linear-style init (uniform(-1/sqrt(in), 1/sqrt(in)))."""
    in_sizes = [input_size] + hidden_sizes
    out_sizes = hidden_sizes + [output_size]
    weights, biases = [], []
    for in_s, out_s in zip(in_sizes, out_sizes):
        key, kw, kb = jax.random.split(key, 3)
        bound = 1.0 / jnp.sqrt(jnp.float32(in_s))
        weights.append(jax.random.uniform(kw, (out_s, in_s), jnp.float32, -bound, bound))
        biases.append(jax.random.uniform(kb, (out_s,), jnp.float32, -bound, bound))
    return weights, biases


if __name__ == "__main__":
    # ACAS-Xu style network at small scale: 5 inputs, two hidden layers of 32, 5 outputs.
    # TODO(synk): normalize_inputs / denormalize_outputs and NNET file I/O are outside
    # AcasNet.forward in the spec and are not part of this kernel.
    input_size, hidden_sizes, output_size = 5, [32, 32], 5
    batch = 2

    key = jax.random.PRNGKey(0)
    key, kx = jax.random.split(key)
    x = jax.random.normal(kx, (batch, input_size), jnp.float32)

    weights, biases = _init_params(key, input_size, hidden_sizes, output_size)

    packed = pack_acasnet_params(weights, biases)        # pack once, reuse across calls
    out = acasnet_forward(x, packed, output_size)
    out = jax.block_until_ready(out)

    ref = _reference_forward(x, weights, biases)
    assert out.shape == (batch, output_size)
    assert jnp.allclose(out, ref, atol=1e-5, rtol=1e-5), "mismatch vs reference"

    print("KERNEL_OK")
</pallas_src>

<mosaic_0001>
module attributes {stable_mosaic.version = 11 : i64} {
  func.func @_acasnet_kernel(%arg0: i32, %arg1: memref<8x128xf32, #tpu.memory_space<vmem>>, %arg2: memref<32x8xf32, #tpu.memory_space<vmem>>, %arg3: memref<32x1xf32, #tpu.memory_space<vmem>>, %arg4: memref<32x32xf32, #tpu.memory_space<vmem>>, %arg5: memref<32x1xf32, #tpu.memory_space<vmem>>, %arg6: memref<8x32xf32, #tpu.memory_space<vmem>>, %arg7: memref<8x1xf32, #tpu.memory_space<vmem>>, %arg8: memref<8x128xf32, #tpu.memory_space<vmem>>) attributes {dimension_semantics = [#tpu.dimension_semantics<parallel>], iteration_bounds = array<i64: 1>, scalar_prefetch = 0 : i64, scratch_operands = 0 : i64, tpu.core_type = #tpu.core_type<tc>, window_params = [{transform_indices = @transform_0, window_bounds = array<i64: 8, 128>}, {pipeline_mode = #tpu.pipeline_mode<synchronous>, transform_indices = @transform_1, window_bounds = array<i64: 32, 8>}, {pipeline_mode = #tpu.pipeline_mode<synchronous>, transform_indices = @transform_2, window_bounds = array<i64: 32, 1>}, {pipeline_mode = #tpu.pipeline_mode<synchronous>, transform_indices = @transform_3, window_bounds = array<i64: 32, 32>}, {pipeline_mode = #tpu.pipeline_mode<synchronous>, transform_indices = @transform_4, window_bounds = array<i64: 32, 1>}, {pipeline_mode = #tpu.pipeline_mode<synchronous>, transform_indices = @transform_5, window_bounds = array<i64: 8, 32>}, {pipeline_mode = #tpu.pipeline_mode<synchronous>, transform_indices = @transform_6, window_bounds = array<i64: 8, 1>}, {transform_indices = @transform_7, window_bounds = array<i64: 8, 128>}]} {
    %c0 = arith.constant 0 : index
    %c0_0 = arith.constant 0 : index
    %0 = vector.load %arg1[%c0, %c0_0] : memref<8x128xf32, #tpu.memory_space<vmem>>, vector<8x128xf32>
    %c0_1 = arith.constant 0 : index
    %c0_2 = arith.constant 0 : index
    %1 = vector.load %arg2[%c0_1, %c0_2] : memref<32x8xf32, #tpu.memory_space<vmem>>, vector<32x8xf32>
    %c0_3 = arith.constant 0 : index
    %c0_4 = arith.constant 0 : index
    %2 = vector.load %arg3[%c0_3, %c0_4] : memref<32x1xf32, #tpu.memory_space<vmem>>, vector<32x1xf32>
    %cst = arith.constant dense<0.000000e+00> : vector<32x128xf32>
    %3 = tpu.matmul %1, %0, %cst {dimension_numbers = #tpu.dot_dimension_numbers<[1], [0], [0], [1], [0, 0, 1, 1], [], []>} : vector<32x8xf32>, vector<8x128xf32>, vector<32x128xf32> -> vector<32x128xf32>
    %4 = vector.broadcast %2 : vector<32x1xf32> to vector<32x128xf32>
    %5 = arith.addf %3, %4 : vector<32x128xf32>
    %cst_5 = arith.constant 0.000000e+00 : f32
    %6 = vector.broadcast %cst_5 : f32 to vector<32x128xf32>
    %7 = arith.maximumf %5, %6 : vector<32x128xf32>
    %c0_6 = arith.constant 0 : index
    %c0_7 = arith.constant 0 : index
    %8 = vector.load %arg4[%c0_6, %c0_7] : memref<32x32xf32, #tpu.memory_space<vmem>>, vector<32x32xf32>
    %c0_8 = arith.constant 0 : index
    %c0_9 = arith.constant 0 : index
    %9 = vector.load %arg5[%c0_8, %c0_9] : memref<32x1xf32, #tpu.memory_space<vmem>>, vector<32x1xf32>
    %cst_10 = arith.constant dense<0.000000e+00> : vector<32x128xf32>
    %10 = tpu.matmul %8, %7, %cst_10 {dimension_numbers = #tpu.dot_dimension_numbers<[1], [0], [0], [1], [0, 0, 1, 1], [], []>} : vector<32x32xf32>, vector<32x128xf32>, vector<32x128xf32> -> vector<32x128xf32>
    %11 = vector.broadcast %9 : vector<32x1xf32> to vector<32x128xf32>
    %12 = arith.addf %10, %11 : vector<32x128xf32>
    %cst_11 = arith.constant 0.000000e+00 : f32
    %13 = vector.broadcast %cst_11 : f32 to vector<32x128xf32>
    %14 = arith.maximumf %12, %13 : vector<32x128xf32>
    %c0_12 = arith.constant 0 : index
    %c0_13 = arith.constant 0 : index
    %15 = vector.load %arg6[%c0_12, %c0_13] : memref<8x32xf32, #tpu.memory_space<vmem>>, vector<8x32xf32>
    %c0_14 = arith.constant 0 : index
    %c0_15 = arith.constant 0 : index
    %16 = vector.load %arg7[%c0_14, %c0_15] : memref<8x1xf32, #tpu.memory_space<vmem>>, vector<8x1xf32>
    %cst_16 = arith.constant dense<0.000000e+00> : vector<8x128xf32>
    %17 = tpu.matmul %15, %14, %cst_16 {dimension_numbers = #tpu.dot_dimension_numbers<[1], [0], [0], [1], [0, 0, 1, 1], [], []>} : vector<8x32xf32>, vector<32x128xf32>, vector<8x128xf32> -> vector<8x128xf32>
    %18 = vector.broadcast %16 : vector<8x1xf32> to vector<8x128xf32>
    %19 = arith.addf %17, %18 : vector<8x128xf32>
    %c0_17 = arith.constant 0 : index
    %c0_18 = arith.constant 0 : index
    %20 = vector.load %arg8[%c0_17, %c0_18] : memref<8x128xf32, #tpu.memory_space<vmem>>, vector<8x128xf32>
    tpu.vector_store %arg8[%c0_17, %c0_18], %19 {strides = array<i32>} : memref<8x128xf32, #tpu.memory_space<vmem>>, vector<8x128xf32>,
    return
  }
  func.func @transform_0(%arg0: i32) -> (i32, i32) {
    %c0_i32 = arith.constant 0 : i32
    %c0_i32_0 = arith.constant 0 : i32
    return %c0_i32, %arg0 : i32, i32
  }
  func.func @transform_1(%arg0: i32) -> (i32, i32) {
    %c0_i32 = arith.constant 0 : i32
    %c0_i32_0 = arith.constant 0 : i32
    %c0_i32_1 = arith.constant 0 : i32
    return %c0_i32, %c0_i32_0 : i32, i32
  }
  func.func @transform_2(%arg0: i32) -> (i32, i32) {
    %c0_i32 = arith.constant 0 : i32
    %c0_i32_0 = arith.constant 0 : i32
    %c0_i32_1 = arith.constant 0 : i32
    return %c0_i32, %c0_i32_0 : i32, i32
  }
  func.func @transform_3(%arg0: i32) -> (i32, i32) {
    %c0_i32 = arith.constant 0 : i32
    %c0_i32_0 = arith.constant 0 : i32
    %c0_i32_1 = arith.constant 0 : i32
    return %c0_i32, %c0_i32_0 : i32, i32
  }
  func.func @transform_4(%arg0: i32) -> (i32, i32) {
    %c0_i32 = arith.constant 0 : i32
    %c0_i32_0 = arith.constant 0 : i32
    %c0_i32_1 = arith.constant 0 : i32
    return %c0_i32, %c0_i32_0 : i32, i32
  }
  func.func @transform_5(%arg0: i32) -> (i32, i32) {
    %c0_i32 = arith.constant 0 : i32
    %c0_i32_0 = arith.constant 0 : i32
    %c0_i32_1 = arith.constant 0 : i32
    return %c0_i32, %c0_i32_0 : i32, i32
  }
  func.func @transform_6(%arg0: i32) -> (i32, i32) {
    %c0_i32 = arith.constant 0 : i32
    %c0_i32_0 = arith.constant 0 : i32
    %c0_i32_1 = arith.constant 0 : i32
    return %c0_i32, %c0_i32_0 : i32, i32
  }
  func.func @transform_7(%arg0: i32) -> (i32, i32) {
    %c0_i32 = arith.constant 0 : i32
    %c0_i32_0 = arith.constant 0 : i32
    return %c0_i32, %arg0 : i32, i32
  }
}

</mosaic_0001>

<llo_original>
// kernel: acasnet_forward.1
$region0: #{acasnet_forward.1}
  #allocation0 [shape = 'u32[]', space=smem, size = 0x4, offset = 0x4, fixed_abs, tag = 'smem constant byte address 0x4 - core index']
  #allocation1 [shape = 'u32[144,128]{1,0:T(1,128)}', space=vmem, size = 0x12000, scoped, tag = 'internal scratch']
  %s0 = inlined_call_operand.vmem [shape: f32[8,128], index: 0, kind: input, shape index: {}]
  %s1 = inlined_call_operand.vmem [shape: f32[32,8], index: 1, kind: input, shape index: {}]
  %s2 = inlined_call_operand.vmem [shape: f32[32,1], index: 2, kind: input, shape index: {}]
  %s3 = inlined_call_operand.vmem [shape: f32[32,32], index: 3, kind: input, shape index: {}]
  %s4 = inlined_call_operand.vmem [shape: f32[32,1], index: 4, kind: input, shape index: {}]
  %s5 = inlined_call_operand.vmem [shape: f32[8,32], index: 5, kind: input, shape index: {}]
  %s6 = inlined_call_operand.vmem [shape: f32[8,1], index: 6, kind: input, shape index: {}]
  %s7 = inlined_call_operand.vmem [shape: f32[8,128], index: 7, kind: output, shape index: {}]
  %s8 = sld [smem:[#allocation0]]
  $region38: #{acasnet_forward.1} parent=0
    _
  %s10 = ssub.s32 1, %s8
  %s11 = scalar_select 0, %s10, %s8
  // Predicated region
  $region2: #{acasnet_forward.1} parent=0 // pred_check
    _
  $region3: #{acasnet_forward.1} parent=0 // pred_check_branch
    %13 = sbr.rel (0) target = $region5
  $region4: #{acasnet_forward.1} parent=0 // pred_region
    _
  $region5: #{acasnet_forward.1} parent=0 // pred_fallthru
    _
  // Predicated region
  $region6: #{acasnet_forward.1} parent=0 // pred_check
    _
  $region7: #{acasnet_forward.1} parent=0 // pred_check_branch
    %15 = sbr.rel (0) target = $region9
  $region8: #{acasnet_forward.1} parent=0 // pred_region
    _
  $region9: #{acasnet_forward.1} parent=0 // pred_fallthru
    _
  // Predicated region
  $region10: #{acasnet_forward.1} parent=0 // pred_check
    _
  $region11: #{acasnet_forward.1} parent=0 // pred_check_branch
    %17 = sbr.rel (0) target = $region13
  $region12: #{acasnet_forward.1} parent=0 // pred_region
    _
  $region13: #{acasnet_forward.1} parent=0 // pred_fallthru
    _
  // Predicated region
  $region14: #{acasnet_forward.1} parent=0 // pred_check
    _
  $region15: #{acasnet_forward.1} parent=0 // pred_check_branch
    %19 = sbr.rel (0) target = $region17
  $region16: #{acasnet_forward.1} parent=0 // pred_region
    _
  $region17: #{acasnet_forward.1} parent=0 // pred_fallthru
    _
  // Predicated region
  $region18: #{acasnet_forward.1} parent=0 // pred_check
    _
  $region19: #{acasnet_forward.1} parent=0 // pred_check_branch
    %21 = sbr.rel (0) target = $region21
  $region20: #{acasnet_forward.1} parent=0 // pred_region
    _
  $region21: #{acasnet_forward.1} parent=0 // pred_fallthru
    _
  // Predicated region
  $region22: #{acasnet_forward.1} parent=0 // pred_check
    _
  $region23: #{acasnet_forward.1} parent=0 // pred_check_branch
    %23 = sbr.rel (0) target = $region25
  $region24: #{acasnet_forward.1} parent=0 // pred_region
    _
  $region25: #{acasnet_forward.1} parent=0 // pred_fallthru
    _
  // Predicated region
  $region26: #{acasnet_forward.1} parent=0 // pred_check
    _
  $region27: #{acasnet_forward.1} parent=0 // pred_check_branch
    %25 = sbr.rel (0) target = $region29
  $region28: #{acasnet_forward.1} parent=0 // pred_region
    _
  $region29: #{acasnet_forward.1} parent=0 // pred_fallthru
    _
  %v26 = vld [vmem:[%s0] sm:$0xff]
  %v27 = vld [vmem:[%s1] sm:$0xff]
  %v28 = vld [vmem:[%s1 + $0x8] sm:$0xff]
  %v29 = vld [vmem:[%s1 + $0x10] sm:$0xff]
  %v30 = vld [vmem:[%s1 + $0x18] sm:$0xff]
  %v31 = vld [vmem:[%s2] sm:$0xff]
  %v32 = vld [vmem:[%s2 + $0x8] sm:$0xff]
  %v33 = vld [vmem:[%s2 + $0x10] sm:$0xff]
  %v34 = vld [vmem:[%s2 + $0x18] sm:$0xff]
  %36 = vset.pattern.permute.xlu0 0
  %37 = vperm.xlu0 %36, %v31
  %v38 = vpop.permute.xlu0 %37
  %41 = vset.pattern.permute.xlu0 0
  %42 = vperm.xlu0 %41, %v32
  %v43 = vpop.permute.xlu0 %42
  %46 = vset.pattern.permute.xlu0 0
  %47 = vperm.xlu0 %46, %v33
  %v48 = vpop.permute.xlu0 %47
  %51 = vset.pattern.permute.xlu0 0
  %52 = vperm.xlu0 %51, %v34
  %v53 = vpop.permute.xlu0 %52
  %vm55 = vcmask 64512
  %v57 = vsel %vm55, %v27, 0
  %v60 = vsel %vm55, %v28, 0
  %v63 = vsel %vm55, %v29, 0
  %v66 = vsel %vm55, %v30, 0
  %68 = vmatprep.subr.mxu0 0.0
  %69 = vmatpush1.msra.mxu0 0.0
  %70 = vmatprep.subr.mxu0 0.0
  %71 = vmatpush1.msra.mxu0 0.0
  %72 = vmatprep.subr.mxu0 0.0
  %73 = vmatpush1.msra.mxu0 0.0
  %74 = vmatprep.subr.mxu0 0.0
  %75 = vmatpush1.msra.mxu0 0.0
  %76 = vmatprep.subr.mxu0 0.0
  %77 = vmatpush1.msra.mxu0 0.0
  %78 = vmatprep.subr.mxu0 0.0
  %79 = vmatpush1.msra.mxu0 0.0
  %80 = vmatprep.subr.mxu0 0.0
  %81 = vmatpush1.msra.mxu0 0.0
  %82 = vmatprep.subr.mxu0 0.0
  %83 = vmatpush1.msra.mxu0 0.0
  %84 = vmatprep.subr.mxu0 0.0
  %85 = vmatpush1.msra.mxu0 0.0
  %86 = vmatprep.subr.mxu0 0.0
  %87 = vmatpush1.msra.mxu0 0.0
  %88 = vmatprep.subr.mxu0 0.0
  %89 = vmatpush1.msra.mxu0 0.0
  %90 = vmatprep.subr.mxu0 0.0
  %91 = vmatpush1.msra.mxu0 0.0
  %92 = vmatprep.subr.mxu0 0.0
  %93 = vmatpush1.msra.mxu0 0.0
  %94 = vmatprep.subr.mxu0 0.0
  %95 = vmatpush1.msra.mxu0 0.0
  %96 = vmatprep.subr.mxu0 0.0
  %97 = vmatpush1.msra.mxu0 0.0
  %98 = vmatprep.subr.mxu0 0.0
  %99 = vmatpush1.msra.mxu0 %v26
  %100 = vmatprep.subr.mxu0 0.0
  %101 = vmatpush2.msra.mxu0 0.0
  %102 = vmatprep.subr.mxu0 0.0
  %103 = vmatpush2.msra.mxu0 0.0
  %104 = vmatprep.subr.mxu0 0.0
  %105 = vmatpush2.msra.mxu0 0.0
  %106 = vmatprep.subr.mxu0 0.0
  %107 = vmatpush2.msra.mxu0 0.0
  %108 = vmatprep.subr.mxu0 0.0
  %109 = vmatpush2.msra.mxu0 0.0
  %110 = vmatprep.subr.mxu0 0.0
  %111 = vmatpush2.msra.mxu0 0.0
  %112 = vmatprep.subr.mxu0 0.0
  %113 = vmatpush2.msra.mxu0 0.0
  %114 = vmatprep.subr.mxu0 0.0
  %115 = vmatpush2.msra.mxu0 0.0
  %116 = vmatprep.subr.mxu0 0.0
  %117 = vmatpush2.msra.mxu0 0.0
  %118 = vmatprep.subr.mxu0 0.0
  %119 = vmatpush2.msra.mxu0 0.0
  %120 = vmatprep.subr.mxu0 0.0
  %121 = vmatpush2.msra.mxu0 0.0
  %122 = vmatprep.subr.mxu0 0.0
  %123 = vmatpush2.msra.mxu0 0.0
  %124 = vmatprep.subr.mxu0 0.0
  %125 = vmatpush2.msra.mxu0 0.0
  %126 = vmatprep.subr.mxu0 0.0
  %127 = vmatpush2.msra.mxu0 0.0
  %128 = vmatprep.subr.mxu0 0.0
  %129 = vmatpush2.msra.mxu0 0.0
  %130 = vmatprep.subr.mxu0 0.0
  %131 = vmatpush2.msra.mxu0 0.0
  %132 = vmatprep.mubr.f32.mxu0 0.0
  %133 = vmatmul.mubr.f32.gmra.mxu0 %v57
  %v134 = vpop.f32.mrf.mxu0
  %v135 = vadd.f32 %v38, %v134
  %v136 = vpop.f32.mrf.mxu0
  %137 = vmatprep.mubr.f32.mxu0 0.0
  %138 = vmatmul.mubr.f32.gmra.mxu0 %v60
  %v139 = vpop.f32.mrf.mxu0
  %v140 = vadd.f32 %v43, %v139
  %v141 = vpop.f32.mrf.mxu0
  %142 = vmatprep.mubr.f32.mxu0 0.0
  %143 = vmatmul.mubr.f32.gmra.mxu0 %v63
  %v144 = vpop.f32.mrf.mxu0
  %v145 = vadd.f32 %v48, %v144
  %v146 = vpop.f32.mrf.mxu0
  %147 = vmatprep.mubr.f32.mxu0 0.0
  %148 = vmatmul.mubr.f32.gmra.mxu0 %v66
  %v149 = vpop.f32.mrf.mxu0
  %v150 = vadd.f32 %v53, %v149
  %v151 = vpop.f32.mrf.mxu0
  %152 = vdwg.mxu0
  %v153 = vmax.f32 %v135, 0.0
  %v154 = vmax.f32 %v140, 0.0
  %v155 = vmax.f32 %v145, 0.0
  %v156 = vmax.f32 %v150, 0.0
  %v157 = vld [vmem:[%s3] sm:$0xff]
  %v158 = vld [vmem:[%s3 + $0x8] sm:$0xff]
  %v159 = vld [vmem:[%s3 + $0x10] sm:$0xff]
  %v160 = vld [vmem:[%s3 + $0x18] sm:$0xff]
  %v161 = vld [vmem:[%s4] sm:$0xff]
  %v162 = vld [vmem:[%s4 + $0x8] sm:$0xff]
  %v163 = vld [vmem:[%s4 + $0x10] sm:$0xff]
  %v164 = vld [vmem:[%s4 + $0x18] sm:$0xff]
  %166 = vset.pattern.permute.xlu0 0
  %167 = vperm.xlu0 %166, %v161
  %v168 = vpop.permute.xlu0 %167
  %171 = vset.pattern.permute.xlu0 0
  %172 = vperm.xlu0 %171, %v162
  %v173 = vpop.permute.xlu0 %172
  %176 = vset.pattern.permute.xlu0 0
  %177 = vperm.xlu0 %176, %v163
  %v178 = vpop.permute.xlu0 %177
  %181 = vset.pattern.permute.xlu0 0
  %182 = vperm.xlu0 %181, %v164
  %v183 = vpop.permute.xlu0 %182
  %vm185 = vcmask 261120
  %v187 = vsel %vm185, %v157, 0
  %v190 = vsel %vm185, %v158, 0
  %v193 = vsel %vm185, %v159, 0
  %v196 = vsel %vm185, %v160, 0
  %198 = vmatprep.subr.mxu0 0.0
  %199 = vmatpush1.msra.mxu0 0.0
  %200 = vmatprep.subr.mxu0 0.0
  %201 = vmatpush1.msra.mxu0 0.0
  %202 = vmatprep.subr.mxu0 0.0
  %203 = vmatpush1.msra.mxu0 0.0
  %204 = vmatprep.subr.mxu0 0.0
  %205 = vmatpush1.msra.mxu0 0.0
  %206 = vmatprep.subr.mxu0 0.0
  %207 = vmatpush1.msra.mxu0 0.0
  %208 = vmatprep.subr.mxu0 0.0
  %209 = vmatpush1.msra.mxu0 0.0
  %210 = vmatprep.subr.mxu0 0.0
  %211 = vmatpush1.msra.mxu0 0.0
  %212 = vmatprep.subr.mxu0 0.0
  %213 = vmatpush1.msra.mxu0 0.0
  %214 = vmatprep.subr.mxu0 0.0
  %215 = vmatpush1.msra.mxu0 0.0
  %216 = vmatprep.subr.mxu0 0.0
  %217 = vmatpush1.msra.mxu0 0.0
  %218 = vmatprep.subr.mxu0 0.0
  %219 = vmatpush1.msra.mxu0 0.0
  %220 = vmatprep.subr.mxu0 0.0
  %221 = vmatpush1.msra.mxu0 0.0
  %222 = vmatprep.subr.mxu0 0.0
  %223 = vmatpush1.msra.mxu0 %v156
  %224 = vmatprep.subr.mxu0 0.0
  %225 = vmatpush1.msra.mxu0 %v155
  %226 = vmatprep.subr.mxu0 0.0
  %227 = vmatpush1.msra.mxu0 %v154
  %228 = vmatprep.subr.mxu0 0.0
  %229 = vmatpush1.msra.mxu0 %v153
  %230 = vmatprep.subr.mxu0 0.0
  %231 = vmatpush2.msra.mxu0 0.0
  %232 = vmatprep.subr.mxu0 0.0
  %233 = vmatpush2.msra.mxu0 0.0
  %234 = vmatprep.subr.mxu0 0.0
  %235 = vmatpush2.msra.mxu0 0.0
  %236 = vmatprep.subr.mxu0 0.0
  %237 = vmatpush2.msra.mxu0 0.0
  %238 = vmatprep.subr.mxu0 0.0
  %239 = vmatpush2.msra.mxu0 0.0
  %240 = vmatprep.subr.mxu0 0.0
  %241 = vmatpush2.msra.mxu0 0.0
  %242 = vmatprep.subr.mxu0 0.0
  %243 = vmatpush2.msra.mxu0 0.0
  %244 = vmatprep.subr.mxu0 0.0
  %245 = vmatpush2.msra.mxu0 0.0
  %246 = vmatprep.subr.mxu0 0.0
  %247 = vmatpush2.msra.mxu0 0.0
  %248 = vmatprep.subr.mxu0 0.0
  %249 = vmatpush2.msra.mxu0 0.0
  %250 = vmatprep.subr.mxu0 0.0
  %251 = vmatpush2.msra.mxu0 0.0
  %252 = vmatprep.subr.mxu0 0.0
  %253 = vmatpush2.msra.mxu0 0.0
  %254 = vmatprep.subr.mxu0 0.0
  %255 = vmatpush2.msra.mxu0 0.0
  %256 = vmatprep.subr.mxu0 0.0
  %257 = vmatpush2.msra.mxu0 0.0
  %258 = vmatprep.subr.mxu0 0.0
  %259 = vmatpush2.msra.mxu0 0.0
  %260 = vmatprep.subr.mxu0 0.0
  %261 = vmatpush2.msra.mxu0 0.0
  %262 = vmatprep.mubr.f32.mxu0 0.0
  %263 = vmatmul.mubr.f32.gmra.mxu0 %v187
  %v264 = vpop.f32.mrf.mxu0
  %v265 = vadd.f32 %v168, %v264
  %v266 = vpop.f32.mrf.mxu0
  %267 = vmatprep.mubr.f32.mxu0 0.0
  %268 = vmatmul.mubr.f32.gmra.mxu0 %v190
  %v269 = vpop.f32.mrf.mxu0
  %v270 = vadd.f32 %v173, %v269
  %v271 = vpop.f32.mrf.mxu0
  %272 = vmatprep.mubr.f32.mxu0 0.0
  %273 = vmatmul.mubr.f32.gmra.mxu0 %v193
  %v274 = vpop.f32.mrf.mxu0
  %v275 = vadd.f32 %v178, %v274
  %v276 = vpop.f32.mrf.mxu0
  %277 = vmatprep.mubr.f32.mxu0 0.0
  %278 = vmatmul.mubr.f32.gmra.mxu0 %v196
  %v279 = vpop.f32.mrf.mxu0
  %v280 = vadd.f32 %v183, %v279
  %v281 = vpop.f32.mrf.mxu0
  %282 = vdwg.mxu0
  %v283 = vmax.f32 %v265, 0.0
  %v284 = vmax.f32 %v270, 0.0
  %v285 = vmax.f32 %v275, 0.0
  %v286 = vmax.f32 %v280, 0.0
  %v287 = vld [vmem:[%s5] sm:$0xff]
  %v288 = vld [vmem:[%s6] sm:$0xff]
  %290 = vset.pattern.permute.xlu0 0
  %291 = vperm.xlu0 %290, %v288
  %v292 = vpop.permute.xlu0 %291
  %v295 = vsel %vm185, %v287, 0
  %297 = vmatprep.subr.mxu0 0.0
  %298 = vmatpush1.msra.mxu0 0.0
  %299 = vmatprep.subr.mxu0 0.0
  %300 = vmatpush1.msra.mxu0 0.0
  %301 = vmatprep.subr.mxu0 0.0
  %302 = vmatpush1.msra.mxu0 0.0
  %303 = vmatprep.subr.mxu0 0.0
  %304 = vmatpush1.msra.mxu0 0.0
  %305 = vmatprep.subr.mxu0 0.0
  %306 = vmatpush1.msra.mxu0 0.0
  %307 = vmatprep.subr.mxu0 0.0
  %308 = vmatpush1.msra.mxu0 0.0
  %309 = vmatprep.subr.mxu0 0.0
  %310 = vmatpush1.msra.mxu0 0.0
  %311 = vmatprep.subr.mxu0 0.0
  %312 = vmatpush1.msra.mxu0 0.0
  %313 = vmatprep.subr.mxu0 0.0
  %314 = vmatpush1.msra.mxu0 0.0
  %315 = vmatprep.subr.mxu0 0.0
  %316 = vmatpush1.msra.mxu0 0.0
  %317 = vmatprep.subr.mxu0 0.0
  %318 = vmatpush1.msra.mxu0 0.0
  %319 = vmatprep.subr.mxu0 0.0
  %320 = vmatpush1.msra.mxu0 0.0
  %321 = vmatprep.subr.mxu0 0.0
  %322 = vmatpush1.msra.mxu0 %v286
  %323 = vmatprep.subr.mxu0 0.0
  %324 = vmatpush1.msra.mxu0 %v285
  %325 = vmatprep.subr.mxu0 0.0
  %326 = vmatpush1.msra.mxu0 %v284
  %327 = vmatprep.subr.mxu0 0.0
  %328 = vmatpush1.msra.mxu0 %v283
  %329 = vmatprep.subr.mxu0 0.0
  %330 = vmatpush2.msra.mxu0 0.0
  %331 = vmatprep.subr.mxu0 0.0
  %332 = vmatpush2.msra.mxu0 0.0
  %333 = vmatprep.subr.mxu0 0.0
  %334 = vmatpush2.msra.mxu0 0.0
  %335 = vmatprep.subr.mxu0 0.0
  %336 = vmatpush2.msra.mxu0 0.0
  %337 = vmatprep.subr.mxu0 0.0
  %338 = vmatpush2.msra.mxu0 0.0
  %339 = vmatprep.subr.mxu0 0.0
  %340 = vmatpush2.msra.mxu0 0.0
  %341 = vmatprep.subr.mxu0 0.0
  %342 = vmatpush2.msra.mxu0 0.0
  %343 = vmatprep.subr.mxu0 0.0
  %344 = vmatpush2.msra.mxu0 0.0
  %345 = vmatprep.subr.mxu0 0.0
  %346 = vmatpush2.msra.mxu0 0.0
  %347 = vmatprep.subr.mxu0 0.0
  %348 = vmatpush2.msra.mxu0 0.0
  %349 = vmatprep.subr.mxu0 0.0
  %350 = vmatpush2.msra.mxu0 0.0
  %351 = vmatprep.subr.mxu0 0.0
  %352 = vmatpush2.msra.mxu0 0.0
  %353 = vmatprep.subr.mxu0 0.0
  %354 = vmatpush2.msra.mxu0 0.0
  %355 = vmatprep.subr.mxu0 0.0
  %356 = vmatpush2.msra.mxu0 0.0
  %357 = vmatprep.subr.mxu0 0.0
  %358 = vmatpush2.msra.mxu0 0.0
  %359 = vmatprep.subr.mxu0 0.0
  %360 = vmatpush2.msra.mxu0 0.0
  %361 = vmatprep.mubr.f32.mxu0 0.0
  %362 = vmatmul.mubr.f32.gmra.mxu0 %v295
  %v363 = vpop.f32.mrf.mxu0
  %v364 = vadd.f32 %v292, %v363
  %v365 = vpop.f32.mrf.mxu0
  %366 = vdwg.mxu0
  %367 = vst [vmem:[%s7] sm:$0xff] %v364
  // Predicated region
  $region30: #{acasnet_forward.1} parent=0 // pred_check
    _
  $region31: #{acasnet_forward.1} parent=0 // pred_check_branch
    %369 = sbr.rel (0) target = $region33
  $region32: #{acasnet_forward.1} parent=0 // pred_region
    _
  $region33: #{acasnet_forward.1} parent=0 // pred_fallthru
    _
  // Predicated region
  $region34: #{acasnet_forward.1} parent=0 // pred_check
    _
  $region35: #{acasnet_forward.1} parent=0 // pred_check_branch
    %371 = sbr.rel (0) target = $region37
  $region36: #{acasnet_forward.1} parent=0 // pred_region
    _
  $region37: #{acasnet_forward.1} parent=0 // pred_fallthru
    _

</llo_original>
